<compile_context>
chip_gen: v5e
topology: v5e:2x2
jax: 0.10.0
libtpu: 0.0.40
codegen_flags: <defaults>
</compile_context>

<pallas_src>
import functools

import jax
import jax.numpy as jnp
from jax import lax
from jax.experimental import pallas as pl
from jax.experimental.pallas import tpu as pltpu


def _hyperconv_kernel(adj_ref, emb_ref, out_ref, acc_ref, *, layers, precision):
    # adj_ref : (N, N)   full adjacency, resident in VMEM (single buffer)
    # emb_ref : (N, tD)  one feature-column tile of the embedding
    # out_ref : (N, tD)  corresponding output tile
    # acc_ref : (N, tD)  f32 VMEM scratch accumulator (running hop sum)
    adj = adj_ref[...]
    emb = emb_ref[...]

    acc_ref[...] = emb.astype(jnp.float32)      # hop 0
    cur = emb.astype(adj.dtype)                 # current-hop propagation input

    def hop(cur):
        # One MXU matmul (N x N) @ (N x tD) with f32 accumulation, then add
        # into the VMEM scratch accumulator (VPU add + store).
        nxt = jnp.dot(adj, cur, precision=precision,
                      preferred_element_type=jnp.float32)
        acc_ref[...] += nxt
        return nxt.astype(adj.dtype)

    if layers <= 8:
        # Short fixed hop chain: Python unroll. With acc in VMEM scratch the
        # only large live value is `cur`, so this stays within the vreg file.
        for _ in range(layers):
            cur = hop(cur)
    else:
        # Longer chains: visible loop bounds live ranges; unroll=2 recovers
        # scheduling freedom for the LLO scheduler.
        cur = lax.fori_loop(0, layers, lambda _, c: hop(c), cur, unroll=2)

    out_ref[...] = acc_ref[...].astype(out_ref.dtype)


def hyper_conv(adj, embedding, *, layers, tile_d=None,
               adj_dtype=jnp.bfloat16, precision=None):
    """sum_{i=0..layers} adj^i @ embedding, computed in a Pallas TPU kernel.

    adj_dtype=jnp.bfloat16 (default) quantizes adj and the per-hop propagation
    input to bf16 each hop (error compounds with `layers`); accumulation is f32.
    Pass adj_dtype=None (and optionally precision=lax.Precision.HIGHEST) for a
    full-f32 fidelity path.
    """
    n, n2 = adj.shape
    assert n == n2, "adj must be square"
    n_e, d = embedding.shape
    assert n_e == n, "adj / embedding node-count mismatch"

    if adj_dtype is not None:
        adj = adj.astype(adj_dtype)

    # --- pad the feature dim to a lane-dense multiple of 128 -----------------
    d_pad = max(128, ((d + 127) // 128) * 128)
    emb_in = embedding if d_pad == d else jnp.pad(
        embedding, ((0, 0), (0, d_pad - d)))

    # --- generation-aware VMEM budget -----------------------------------------
    try:
        vmem_cap = int(pltpu.get_tpu_info().vmem_capacity_bytes)
    except Exception:  # pragma: no cover - conservative fallback (v7x-sized)
        vmem_cap = 64 << 20
    vmem_budget = vmem_cap - (4 << 20)          # headroom for compiler scratch

    adj_bytes = n * n * jnp.dtype(adj.dtype).itemsize
    emb_item = jnp.dtype(embedding.dtype).itemsize

    def footprint(td):
        # adj (single buffer) + double-buffered emb/out tiles
        # + f32 scratch accumulator + f32 current-hop temporary.
        tile_bytes = n * td * emb_item
        f32_tmp = 2 * n * td * 4
        return adj_bytes + 4 * tile_bytes + f32_tmp + (2 << 20)

    # --- tile_d selection ------------------------------------------------------
    if tile_d is None:
        cands = [c for c in (512, 256, 128)
                 if d_pad % c == 0 and footprint(c) <= vmem_budget]
        if not cands:
            cands = [128]
        tile_d = cands[0]                       # widest fitting tile (full MXU fill)
        # Low-VMEM chips (v7x: 64 MiB/TC) have 2 TensorCores: prefer a tile
        # that yields >= 2 grid steps so "parallel" can shard across cores.
        if vmem_cap <= (64 << 20):
            for c in cands:
                if d_pad // c >= 2:
                    tile_d = c
                    break
    assert d_pad % tile_d == 0, "padded feature dim must be divisible by tile_d"

    needed_bytes = footprint(tile_d)
    vmem_limit = None
    if needed_bytes > (16 << 20):               # exceeds v5e's default scoped limit
        vmem_limit = int(min(needed_bytes, vmem_cap - (2 << 20)))

    cost = pl.CostEstimate(
        flops=2 * layers * n * n * d_pad,
        transcendentals=0,
        bytes_accessed=adj_bytes + 2 * n * d_pad * emb_item,
    )

    kernel = functools.partial(_hyperconv_kernel, layers=layers,
                               precision=precision)

    out = pl.pallas_call(
        kernel,
        out_shape=jax.ShapeDtypeStruct((n, d_pad), embedding.dtype),
        grid_spec=pltpu.PrefetchScalarGridSpec(
            num_scalar_prefetch=0,
            grid=(d_pad // tile_d,),
            in_specs=[
                # adj: whole array resident in VMEM, single-buffered.
                pl.BlockSpec(memory_space=pltpu.MemorySpace.VMEM),
                # one wide, lane-dense feature-column tile per grid step.
                pl.BlockSpec((n, tile_d), lambda j: (0, j)),
            ],
            out_specs=pl.BlockSpec((n, tile_d), lambda j: (0, j)),
            scratch_shapes=[pltpu.VMEM((n, tile_d), jnp.float32)],
        ),
        compiler_params=pltpu.CompilerParams(
            dimension_semantics=("parallel",),
            vmem_limit_bytes=vmem_limit,
        ),
        cost_estimate=cost,
    )(adj, emb_in)

    if d_pad != d:
        out = out[:, :d]
    return out


def hyper_conv_ref(adj, embedding, *, layers):
    """Pure-JAX reference matching the PyTorch forward exactly."""
    all_emb = embedding.astype(jnp.float32)
    final = [all_emb]
    a = adj.astype(jnp.float32)
    for _ in range(layers):
        all_emb = a @ all_emb
        final.append(all_emb)
    return jnp.sum(jnp.stack(final), axis=0).astype(embedding.dtype)


def _make_inputs(key, n, d):
    k_adj, k_emb = jax.random.split(key)
    # Deterministic synthetic "normalized adjacency": random sparse-ish dense
    # matrix, row-normalized so repeated propagation stays well-scaled.
    raw = jax.random.uniform(k_adj, (n, n), dtype=jnp.float32)
    mask = (raw > 0.9).astype(jnp.float32)          # ~10% nonzeros
    adj = mask * raw
    row_sum = jnp.maximum(adj.sum(axis=1, keepdims=True), 1e-6)
    adj = adj / row_sum
    embedding = jax.random.normal(k_emb, (n, d), dtype=jnp.float32)
    return adj, embedding


if __name__ == "__main__":
    key = jax.random.PRNGKey(0)

    # --- main config: N=128 nodes, D=256 features, 3 hops ---------------------
    LAYERS, N, D = 3, 128, 256
    adj, embedding = _make_inputs(key, N, D)
    ref = hyper_conv_ref(adj, embedding, layers=LAYERS)

    # f32-adjacency fidelity path (tight tolerance vs. the f32 reference).
    out_f32 = hyper_conv(adj, embedding, layers=LAYERS, adj_dtype=None)
    out_f32 = jax.block_until_ready(out_f32)
    assert out_f32.shape == (N, D), out_f32.shape
    assert jnp.allclose(out_f32, ref, atol=1e-4, rtol=1e-4), (
        float(jnp.max(jnp.abs(out_f32 - ref))))

    # Default bf16-adjacency path (MXU throughput / VMEM capacity): loose
    # tolerance due to per-hop bf16 rounding compounding with `layers`.
    out_bf16 = hyper_conv(adj, embedding, layers=LAYERS)
    out_bf16 = jax.block_until_ready(out_bf16)
    assert out_bf16.shape == (N, D), out_bf16.shape
    assert jnp.allclose(out_bf16, ref, atol=5e-2, rtol=5e-2), (
        float(jnp.max(jnp.abs(out_bf16 - ref))))

    # Non-multiple-of-128 feature dim: exercises the pad-and-slice path.
    D_ODD = 200
    adj2, emb2 = _make_inputs(jax.random.PRNGKey(1), N, D_ODD)
    ref2 = hyper_conv_ref(adj2, emb2, layers=LAYERS)
    out2 = jax.block_until_ready(
        hyper_conv(adj2, emb2, layers=LAYERS, adj_dtype=None))
    assert out2.shape == (N, D_ODD), out2.shape
    assert jnp.allclose(out2, ref2, atol=1e-4, rtol=1e-4), (
        float(jnp.max(jnp.abs(out2 - ref2))))

    # Deep hop chain: exercises the lax.fori_loop(unroll=2) path.
    LAYERS_DEEP, D_SMALL = 10, 128
    adj3, emb3 = _make_inputs(jax.random.PRNGKey(2), N, D_SMALL)
    ref3 = hyper_conv_ref(adj3, emb3, layers=LAYERS_DEEP)
    out3 = jax.block_until_ready(
        hyper_conv(adj3, emb3, layers=LAYERS_DEEP, adj_dtype=None))
    assert out3.shape == (N, D_SMALL), out3.shape
    assert jnp.allclose(out3, ref3, atol=1e-3, rtol=1e-3), (
        float(jnp.max(jnp.abs(out3 - ref3))))

    print("KERNEL_OK")
</pallas_src>

<mosaic_0001>
module attributes {stable_mosaic.version = 11 : i64} {
  func.func @_hyperconv_kernel(%arg0: i32, %arg1: memref<128x128xf32, #tpu.memory_space<vmem>>, %arg2: memref<128x128xf32, #tpu.memory_space<vmem>>, %arg3: memref<128x128xf32, #tpu.memory_space<vmem>>, %arg4: memref<128x128xf32, #tpu.memory_space<vmem>>) attributes {dimension_semantics = [#tpu.dimension_semantics<parallel>], iteration_bounds = array<i64: 2>, scalar_prefetch = 0 : i64, scratch_operands = 1 : i64, tpu.core_type = #tpu.core_type<tc>, window_params = [{pipeline_mode = #tpu.pipeline_mode<synchronous>, transform_indices = @transform_0, window_bounds = array<i64: 128, 128>}, {transform_indices = @transform_1, window_bounds = array<i64: 128, 128>}, {transform_indices = @transform_2, window_bounds = array<i64: 128, 128>}]} {
    %c0 = arith.constant 0 : index
    %c0_0 = arith.constant 0 : index
    %0 = vector.load %arg1[%c0, %c0_0] : memref<128x128xf32, #tpu.memory_space<vmem>>, vector<128x128xf32>
    %c0_1 = arith.constant 0 : index
    %c0_2 = arith.constant 0 : index
    %1 = vector.load %arg2[%c0_1, %c0_2] : memref<128x128xf32, #tpu.memory_space<vmem>>, vector<128x128xf32>
    %c0_3 = arith.constant 0 : index
    %c0_4 = arith.constant 0 : index
    %2 = vector.load %arg4[%c0_3, %c0_4] : memref<128x128xf32, #tpu.memory_space<vmem>>, vector<128x128xf32>
    tpu.vector_store %arg4[%c0_3, %c0_4], %1 {strides = array<i32>} : memref<128x128xf32, #tpu.memory_space<vmem>>, vector<128x128xf32>,
    %cst = arith.constant dense<0.000000e+00> : vector<128x128xf32>
    %3 = tpu.matmul %0, %1, %cst {dimension_numbers = #tpu.dot_dimension_numbers<[1], [0], [0], [1], [0, 0, 1, 1], [], []>} : vector<128x128xf32>, vector<128x128xf32>, vector<128x128xf32> -> vector<128x128xf32>
    %c0_5 = arith.constant 0 : index
    %c0_6 = arith.constant 0 : index
    %4 = vector.load %arg4[%c0_5, %c0_6] : memref<128x128xf32, #tpu.memory_space<vmem>>, vector<128x128xf32>
    %5 = arith.addf %4, %3 : vector<128x128xf32>
    %c0_7 = arith.constant 0 : index
    %c0_8 = arith.constant 0 : index
    %6 = vector.load %arg4[%c0_7, %c0_8] : memref<128x128xf32, #tpu.memory_space<vmem>>, vector<128x128xf32>
    tpu.vector_store %arg4[%c0_7, %c0_8], %5 {strides = array<i32>} : memref<128x128xf32, #tpu.memory_space<vmem>>, vector<128x128xf32>,
    %cst_9 = arith.constant dense<0.000000e+00> : vector<128x128xf32>
    %7 = tpu.matmul %0, %3, %cst_9 {dimension_numbers = #tpu.dot_dimension_numbers<[1], [0], [0], [1], [0, 0, 1, 1], [], []>} : vector<128x128xf32>, vector<128x128xf32>, vector<128x128xf32> -> vector<128x128xf32>
    %c0_10 = arith.constant 0 : index
    %c0_11 = arith.constant 0 : index
    %8 = vector.load %arg4[%c0_10, %c0_11] : memref<128x128xf32, #tpu.memory_space<vmem>>, vector<128x128xf32>
    %9 = arith.addf %8, %7 : vector<128x128xf32>
    %c0_12 = arith.constant 0 : index
    %c0_13 = arith.constant 0 : index
    %10 = vector.load %arg4[%c0_12, %c0_13] : memref<128x128xf32, #tpu.memory_space<vmem>>, vector<128x128xf32>
    tpu.vector_store %arg4[%c0_12, %c0_13], %9 {strides = array<i32>} : memref<128x128xf32, #tpu.memory_space<vmem>>, vector<128x128xf32>,
    %cst_14 = arith.constant dense<0.000000e+00> : vector<128x128xf32>
    %11 = tpu.matmul %0, %7, %cst_14 {dimension_numbers = #tpu.dot_dimension_numbers<[1], [0], [0], [1], [0, 0, 1, 1], [], []>} : vector<128x128xf32>, vector<128x128xf32>, vector<128x128xf32> -> vector<128x128xf32>
    %c0_15 = arith.constant 0 : index
    %c0_16 = arith.constant 0 : index
    %12 = vector.load %arg4[%c0_15, %c0_16] : memref<128x128xf32, #tpu.memory_space<vmem>>, vector<128x128xf32>
    %13 = arith.addf %12, %11 : vector<128x128xf32>
    %c0_17 = arith.constant 0 : index
    %c0_18 = arith.constant 0 : index
    %14 = vector.load %arg4[%c0_17, %c0_18] : memref<128x128xf32, #tpu.memory_space<vmem>>, vector<128x128xf32>
    tpu.vector_store %arg4[%c0_17, %c0_18], %13 {strides = array<i32>} : memref<128x128xf32, #tpu.memory_space<vmem>>, vector<128x128xf32>,
    %c0_19 = arith.constant 0 : index
    %c0_20 = arith.constant 0 : index
    %15 = vector.load %arg4[%c0_19, %c0_20] : memref<128x128xf32, #tpu.memory_space<vmem>>, vector<128x128xf32>
    %c0_21 = arith.constant 0 : index
    %c0_22 = arith.constant 0 : index
    %16 = vector.load %arg3[%c0_21, %c0_22] : memref<128x128xf32, #tpu.memory_space<vmem>>, vector<128x128xf32>
    tpu.vector_store %arg3[%c0_21, %c0_22], %15 {strides = array<i32>} : memref<128x128xf32, #tpu.memory_space<vmem>>, vector<128x128xf32>,
    return
  }
  func.func @transform_0(%arg0: i32) -> (i32, i32) {
    %c0_i32 = arith.constant 0 : i32
    %c0_i32_0 = arith.constant 0 : i32
    %c0_i32_1 = arith.constant 0 : i32
    return %c0_i32, %c0_i32_0 : i32, i32
  }
  func.func @transform_1(%arg0: i32) -> (i32, i32) {
    %c0_i32 = arith.constant 0 : i32
    %c0_i32_0 = arith.constant 0 : i32
    return %c0_i32, %arg0 : i32, i32
  }
  func.func @transform_2(%arg0: i32) -> (i32, i32) {
    %c0_i32 = arith.constant 0 : i32
    %c0_i32_0 = arith.constant 0 : i32
    return %c0_i32, %arg0 : i32, i32
  }
}

</mosaic_0001>

<llo_original>
// kernel: tpu_custom_call.1
$region0: #{tpu_custom_call.1}
  #allocation0 [shape = 'u32[]', space=smem, size = 0x4, offset = 0x4, fixed_abs, tag = 'smem constant byte address 0x4 - core index']
  #allocation1 [shape = 'u32[72,128]{1,0:T(1,128)}', space=vmem, size = 0x9000, scoped, tag = 'internal scratch']
  #allocation2 [shape = 'f32[128,128]{1,0:T(8,128)}', space=vmem, size = 0x10000, scoped, tag = 'scratch operand']
  %s0 = inlined_call_operand.hbm [shape: f32[128,128], index: 0, kind: input, shape index: {}]
  %s1 = inlined_call_operand.hbm [shape: f32[128,256], index: 1, kind: input, shape index: {}]
  %s2 = inlined_call_operand.hbm [shape: f32[128,256], index: 2, kind: output, shape index: {}]
  %s3 = sld [smem:[#allocation0]]
  $region49: #{tpu_custom_call.1} parent=0
    _
  %s5 = ssub.s32 1, %s3
  %s6 = scalar_select 0, %s5, %s3
  $region1: #{tpu_custom_call.1} parent=0
    #allocation3 [shape = 'u8[65536]{0}', space=vmem, size = 0x10000, scoped, tag = 'input window, operand 0, single buffered']
    #allocation4 [shape = 's32[2]{0}', space=sflag, size = 0x8, scoped, tag = 'scoped memory for tpu_custom_call.1']
    #allocation5 [shape = 's32[2]{0}', space=sflag, size = 0x8, scoped, tag = 'scoped memory for tpu_custom_call.1']
    #allocation6 [shape = 'u8[131072]{0}', space=vmem, size = 0x20000, scoped, tag = 'input window, operand 1']
    #allocation7 [shape = 's32[2]{0}', space=sflag, size = 0x8, scoped, tag = 'scoped memory for tpu_custom_call.1']
    #allocation8 [shape = 'u8[131072]{0}', space=vmem, size = 0x20000, scoped, tag = 'output window, operand 0']
    %7 = vsyncpa [#allocation4], 0
    %8 = vsyncpa [#allocation7], 0
    %s9 = scalar_lea.sflag [#allocation7], 1
    %10 = vsyncpa %s9, 0
    %11 = vsyncpa [#allocation5], 0
    %s12 = scalar_lea.sflag [#allocation5], 1
    %13 = vsyncpa %s12, 0
    loop: start=0, step=1, limit=4
    $region2: #{tpu_custom_call.1} parent=1 // loop_pre_header
      _
    $region3: #{tpu_custom_call.1} parent=1 // loop_header
      %s15 = sphi 0, %s19
      %p16 = scmp.ge.s32.totalorder %s15, 4
      %s23 = sphi 0, %s23
      %s25 = sphi 0, %s23
      %s26 = sphi 0, %s25
      %s40 = sphi 0, %s26
      %s46 = sphi 0, %s48
      %s49 = sphi 0, %s46
      %s50 = sphi 0, %s49
      %s66 = sphi 0, %s50
      %s72 = sphi 0, %s74
      %s75 = sphi 0, %s72
      %s76 = sphi 0, %s75
      %s92 = sphi 0, %s76
    $region4: #{tpu_custom_call.1} parent=1 // loop_header_branch
      %18 = sbr.rel (%p16) target = $region8
    $region5: #{tpu_custom_call.1} parent=1 // loop_body
      %s20 = ssub.s32 %s15, 1
      %s21 = ssub.s32 %s15, 2
      %s22 = sadd.s32 %s15, 1
      %s24 = sadd.s32 %s23, 1
      %p27 = scmp.eq.s32.totalorder %s15, 1
      %p28 = scmp.ne.s32.totalorder %s23, %s25
      %p29 = scmp.eq.s32.totalorder %s15, 0
      %p30 = por %p28, %p29
      %p31 = scmp.ne.s32.totalorder %s23, %s25
      %p32 = scmp.eq.s32.totalorder %s20, 1
      %p33 = por %p31, %p32
      %p34 = scmp.ne.s32.totalorder %s25, %s26
      %p35 = scmp.eq.s32.totalorder %s20, 0
      %p36 = por %p34, %p35
      %p37 = scmp.ne.s32.totalorder %s25, %s26
      %p38 = scmp.eq.s32.totalorder %s21, 1
      %p39 = por %p37, %p38
      %p41 = scmp.ne.s32.totalorder %s26, %s40
      %p42 = scmp.eq.s32.totalorder %s21, 0
      %p43 = por %p41, %p42
      %s44 = ssub.s32 %s15, %s22
      %p45 = scmp.eq.s32.totalorder %s44, 0
      %s47 = sadd.s32 %s46, 1
      %s48 = scalar_select %p45, %s46, %s47
      %p51 = pneg %p45
      %p52 = scmp.eq.s32.totalorder %s15, 1
      %p53 = por %p51, %p52
      %p54 = scmp.ne.s32.totalorder %s46, %s49
      %p55 = scmp.eq.s32.totalorder %s15, 0
      %p56 = por %p54, %p55
      %p57 = scmp.ne.s32.totalorder %s46, %s49
      %p58 = scmp.eq.s32.totalorder %s20, 1
      %p59 = por %p57, %p58
      %p60 = scmp.ne.s32.totalorder %s49, %s50
      %p61 = scmp.eq.s32.totalorder %s20, 0
      %p62 = por %p60, %p61
      %p63 = scmp.ne.s32.totalorder %s49, %s50
      %p64 = scmp.eq.s32.totalorder %s21, 1
      %p65 = por %p63, %p64
      %p67 = scmp.ne.s32.totalorder %s50, %s66
      %p68 = scmp.eq.s32.totalorder %s21, 0
      %p69 = por %p67, %p68
      %s70 = ssub.s32 %s15, %s22
      %p71 = scmp.eq.s32.totalorder %s70, 0
      %s73 = sadd.s32 %s72, 1
      %s74 = scalar_select %p71, %s72, %s73
      %p77 = pneg %p71
      %p78 = scmp.eq.s32.totalorder %s15, 1
      %p79 = por %p77, %p78
      %p80 = scmp.ne.s32.totalorder %s72, %s75
      %p81 = scmp.eq.s32.totalorder %s15, 0
      %p82 = por %p80, %p81
      %p83 = scmp.ne.s32.totalorder %s72, %s75
      %p84 = scmp.eq.s32.totalorder %s20, 1
      %p85 = por %p83, %p84
      %p86 = scmp.ne.s32.totalorder %s75, %s76
      %p87 = scmp.eq.s32.totalorder %s20, 0
      %p88 = por %p86, %p87
      %p89 = scmp.ne.s32.totalorder %s75, %s76
      %p90 = scmp.eq.s32.totalorder %s21, 1
      %p91 = por %p89, %p90
      %p93 = scmp.ne.s32.totalorder %s76, %s92
      %p94 = scmp.eq.s32.totalorder %s21, 0
      %p95 = por %p93, %p94
      %p96 = scmp.le.s32.totalorder 1, %s15
      %p97 = scmp.lt.s32.totalorder %s15, 3
      %p98 = pnand %p96, %p97
      %p99 = pneg %p98
      // Predicated region
      $region9: #{tpu_custom_call.1} parent=5 // pred_check
        _
      $region10: #{tpu_custom_call.1} parent=5 // pred_check_branch
        %101 = sbr.rel (%p98) target = $region12
      $region11: #{tpu_custom_call.1} parent=5 // pred_region
        %s102 = ssub.s32 %s15, 1
        // Predicated region
        $region13: #{tpu_custom_call.1} parent=11 // pred_check
          %p103 = pneg %p36
        $region14: #{tpu_custom_call.1} parent=11 // pred_check_branch
          %105 = sbr.rel (%p103) target = $region16
        $region15: #{tpu_custom_call.1} parent=11 // pred_region
          %107 = vsyncadd [#allocation4], 0
          %s108 = sshll.u32 %s0, 4
          %s109 = int_to_ptr.hbm [resolvable:$true] %s108
          %s110 = sshll.u32 [#allocation3], 4
          %s111 = int_to_ptr.vmem [resolvable:$true] %s110
          %116 = dma.hbm_to_vmem [thread:$0]  %s109, 2048, %s111, [#allocation4], 128, 128, 8
        $region16: #{tpu_custom_call.1} parent=11 // pred_fallthru
          _
      $region12: #{tpu_custom_call.1} parent=5 // pred_fallthru
        _
      %p117 = scmp.lt.s32.totalorder %s15, 2
      // Predicated region
      $region17: #{tpu_custom_call.1} parent=5 // pred_check
        %p118 = pneg %p117
      $region18: #{tpu_custom_call.1} parent=5 // pred_check_branch
        %120 = sbr.rel (%p118) target = $region20
      $region19: #{tpu_custom_call.1} parent=5 // pred_region
        // Predicated region
        $region21: #{tpu_custom_call.1} parent=19 // pred_check
          %p121 = pneg %p56
        $region22: #{tpu_custom_call.1} parent=19 // pred_check_branch
          %123 = sbr.rel (%p121) target = $region24
        $region23: #{tpu_custom_call.1} parent=19 // pred_region
          %s124 = sand.u32 %s46, 1
          %s125 = scalar_lea.sflag [#allocation7], %s124
          %s126 = sand.u32 %s46, 1
          %s127 = smul.addr %s126, 128
          %s128 = scalar_lea.vmem [#allocation6], %s127
          %130 = vsyncadd %s125, 0
          %s131 = smul.addr %s15, 8
          %s132 = scalar_lea.hbm %s1, %s131
          %s133 = sshll.u32 %s132, 4
          %s134 = int_to_ptr.hbm [resolvable:$true] %s133
          %s135 = sshll.u32 %s128, 4
          %s136 = int_to_ptr.vmem [resolvable:$true] %s135
          %141 = dma.hbm_to_vmem [thread:$0]  %s134, 2048, %s136, %s125, 256, 128, 8
        $region24: #{tpu_custom_call.1} parent=19 // pred_fallthru
          _
      $region20: #{tpu_custom_call.1} parent=5 // pred_fallthru
        _
      %p142 = scmp.le.s32.totalorder 1, %s15
      %p143 = scmp.lt.s32.totalorder %s15, 3
      %p144 = pnand %p142, %p143
      %p145 = pneg %p144
      // Predicated region
      $region25: #{tpu_custom_call.1} parent=5 // pred_check
        _
      $region26: #{tpu_custom_call.1} parent=5 // pred_check_branch
        %147 = sbr.rel (%p144) target = $region28
      $region27: #{tpu_custom_call.1} parent=5 // pred_region
        %s148 = ssub.s32 %s15, 1
        // Predicated region
        $region29: #{tpu_custom_call.1} parent=27 // pred_check
          %p149 = pneg %p36
        $region30: #{tpu_custom_call.1} parent=27 // pred_check_branch
          %151 = sbr.rel (%p149) target = $region32
        $region31: #{tpu_custom_call.1} parent=27 // pred_region
          %153 = dma.done [#allocation4], 2048
        $region32: #{tpu_custom_call.1} parent=27 // pred_fallthru
          _
        %s154 = sand.u32 %s49, 1
        %s155 = scalar_lea.sflag [#allocation7], %s154
        %s156 = sand.u32 %s49, 1
        %s157 = smul.addr %s156, 128
        %s158 = scalar_lea.vmem [#allocation6], %s157
        // Predicated region
        $region33: #{tpu_custom_call.1} parent=27 // pred_check
          %p159 = pneg %p62
        $region34: #{tpu_custom_call.1} parent=27 // pred_check_branch
          %161 = sbr.rel (%p159) target = $region36
        $region35: #{tpu_custom_call.1} parent=27 // pred_region
          %163 = dma.done %s155, 2048
        $region36: #{tpu_custom_call.1} parent=27 // pred_fallthru
          _
        %p164 = pneg %p36
        %p165 = pneg %p33
        %s166 = sand.u32 %s49, 1
        %s167 = scalar_lea.sflag [#allocation7], %s166
        %s168 = sand.u32 %s49, 1
        %s169 = smul.addr %s168, 128
        %s170 = scalar_lea.vmem [#allocation6], %s169
        %p171 = pneg %p62
        %p172 = pneg %p59
        %p173 = pneg %p88
        %p174 = pneg %p85
        %s175 = sand.u32 %s75, 1
        %s176 = scalar_lea.sflag [#allocation5], %s175
        %s177 = sand.u32 %s75, 1
        %s178 = smul.addr %s177, 128
        %s179 = scalar_lea.vmem [#allocation8], %s178
        %v180 = vld [vmem:[#allocation3] sm:$0xff]
        %v181 = vld [vmem:[#allocation3 + $0x8] sm:$0xff]
        %v182 = vld [vmem:[#allocation3 + $0x10] sm:$0xff]
        %v183 = vld [vmem:[#allocation3 + $0x18] sm:$0xff]
        %v184 = vld [vmem:[#allocation3 + $0x20] sm:$0xff]
        %v185 = vld [vmem:[#allocation3 + $0x28] sm:$0xff]
        %v186 = vld [vmem:[#allocation3 + $0x30] sm:$0xff]
        %v187 = vld [vmem:[#allocation3 + $0x38] sm:$0xff]
        %v188 = vld [vmem:[#allocation3 + $0x40] sm:$0xff]
        %v189 = vld [vmem:[#allocation3 + $0x48] sm:$0xff]
        %v190 = vld [vmem:[#allocation3 + $0x50] sm:$0xff]
        %v191 = vld [vmem:[#allocation3 + $0x58] sm:$0xff]
        %v192 = vld [vmem:[#allocation3 + $0x60] sm:$0xff]
        %v193 = vld [vmem:[#allocation3 + $0x68] sm:$0xff]
        %v194 = vld [vmem:[#allocation3 + $0x70] sm:$0xff]
        %v195 = vld [vmem:[#allocation3 + $0x78] sm:$0xff]
        %v196 = vld [vmem:[%s158] sm:$0xff]
        %v197 = vld [vmem:[%s158 + $0x8] sm:$0xff]
        %v198 = vld [vmem:[%s158 + $0x10] sm:$0xff]
        %v199 = vld [vmem:[%s158 + $0x18] sm:$0xff]
        %v200 = vld [vmem:[%s158 + $0x20] sm:$0xff]
        %v201 = vld [vmem:[%s158 + $0x28] sm:$0xff]
        %v202 = vld [vmem:[%s158 + $0x30] sm:$0xff]
        %v203 = vld [vmem:[%s158 + $0x38] sm:$0xff]
        %v204 = vld [vmem:[%s158 + $0x40] sm:$0xff]
        %v205 = vld [vmem:[%s158 + $0x48] sm:$0xff]
        %v206 = vld [vmem:[%s158 + $0x50] sm:$0xff]
        %v207 = vld [vmem:[%s158 + $0x58] sm:$0xff]
        %v208 = vld [vmem:[%s158 + $0x60] sm:$0xff]
        %v209 = vld [vmem:[%s158 + $0x68] sm:$0xff]
        %v210 = vld [vmem:[%s158 + $0x70] sm:$0xff]
        %v211 = vld [vmem:[%s158 + $0x78] sm:$0xff]
        %212 = vst [vmem:[#allocation2] sm:$0xff] %v196
        %213 = vst [vmem:[#allocation2 + $0x8] sm:$0xff] %v197
        %214 = vst [vmem:[#allocation2 + $0x10] sm:$0xff] %v198
        %215 = vst [vmem:[#allocation2 + $0x18] sm:$0xff] %v199
        %216 = vst [vmem:[#allocation2 + $0x20] sm:$0xff] %v200
        %217 = vst [vmem:[#allocation2 + $0x28] sm:$0xff] %v201
        %218 = vst [vmem:[#allocation2 + $0x30] sm:$0xff] %v202
        %219 = vst [vmem:[#allocation2 + $0x38] sm:$0xff] %v203
        %220 = vst [vmem:[#allocation2 + $0x40] sm:$0xff] %v204
        %221 = vst [vmem:[#allocation2 + $0x48] sm:$0xff] %v205
        %222 = vst [vmem:[#allocation2 + $0x50] sm:$0xff] %v206
        %223 = vst [vmem:[#allocation2 + $0x58] sm:$0xff] %v207
        %224 = vst [vmem:[#allocation2 + $0x60] sm:$0xff] %v208
        %225 = vst [vmem:[#allocation2 + $0x68] sm:$0xff] %v209
        %226 = vst [vmem:[#allocation2 + $0x70] sm:$0xff] %v210
        %227 = vst [vmem:[#allocation2 + $0x78] sm:$0xff] %v211
        %228 = vmatpush.msra.mxu0 %v211
        %229 = vmatpush.msra.mxu0 %v210
        %230 = vmatpush.msra.mxu0 %v209
        %231 = vmatpush.msra.mxu0 %v208
        %232 = vmatpush.msra.mxu0 %v207
        %233 = vmatpush.msra.mxu0 %v206
        %234 = vmatpush.msra.mxu0 %v205
        %235 = vmatpush.msra.mxu0 %v204
        %236 = vmatpush.msra.mxu0 %v203
        %237 = vmatpush.msra.mxu0 %v202
        %238 = vmatpush.msra.mxu0 %v201
        %239 = vmatpush.msra.mxu0 %v200
        %240 = vmatpush.msra.mxu0 %v199
        %241 = vmatpush.msra.mxu0 %v198
        %242 = vmatpush.msra.mxu0 %v197
        %243 = vmatpush.msra.mxu0 %v196
        %244 = vmatmul.f32.gmra.mxu0 %v180
        %v245 = vpop.f32.mrf.mxu0
        %v246 = vadd.f32 0.0, %v245
        %247 = vmatmul.f32.gmra.mxu0 %v181
        %v248 = vpop.f32.mrf.mxu0
        %v249 = vadd.f32 0.0, %v248
        %250 = vmatmul.f32.gmra.mxu0 %v182
        %v251 = vpop.f32.mrf.mxu0
        %v252 = vadd.f32 0.0, %v251
        %253 = vmatmul.f32.gmra.mxu0 %v183
        %v254 = vpop.f32.mrf.mxu0
        %v255 = vadd.f32 0.0, %v254
        %256 = vmatmul.f32.gmra.mxu0 %v184
        %v257 = vpop.f32.mrf.mxu0
        %v258 = vadd.f32 0.0, %v257
        %259 = vmatmul.f32.gmra.mxu0 %v185
        %v260 = vpop.f32.mrf.mxu0
        %v261 = vadd.f32 0.0, %v260
        %262 = vmatmul.f32.gmra.mxu0 %v186
        %v263 = vpop.f32.mrf.mxu0
        %v264 = vadd.f32 0.0, %v263
        %265 = vmatmul.f32.gmra.mxu0 %v187
        %v266 = vpop.f32.mrf.mxu0
        %v267 = vadd.f32 0.0, %v266
        %268 = vmatmul.f32.gmra.mxu0 %v188
        %v269 = vpop.f32.mrf.mxu0
        %v270 = vadd.f32 0.0, %v269
        %271 = vmatmul.f32.gmra.mxu0 %v189
        %v272 = vpop.f32.mrf.mxu0
        %v273 = vadd.f32 0.0, %v272
        %274 = vmatmul.f32.gmra.mxu0 %v190
        %v275 = vpop.f32.mrf.mxu0
        %v276 = vadd.f32 0.0, %v275
        %277 = vmatmul.f32.gmra.mxu0 %v191
        %v278 = vpop.f32.mrf.mxu0
        %v279 = vadd.f32 0.0, %v278
        %280 = vmatmul.f32.gmra.mxu0 %v192
        %v281 = vpop.f32.mrf.mxu0
        %v282 = vadd.f32 0.0, %v281
        %283 = vmatmul.f32.gmra.mxu0 %v193
        %v284 = vpop.f32.mrf.mxu0
        %v285 = vadd.f32 0.0, %v284
        %286 = vmatmul.f32.gmra.mxu0 %v194
        %v287 = vpop.f32.mrf.mxu0
        %v288 = vadd.f32 0.0, %v287
        %289 = vmatmul.f32.gmra.mxu0 %v195
        %v290 = vpop.f32.mrf.mxu0
        %v291 = vadd.f32 0.0, %v290
        %292 = vdwg.mxu0
        %v293 = vld [vmem:[#allocation2] sm:$0xff]
        %v294 = vld [vmem:[#allocation2 + $0x8] sm:$0xff]
        %v295 = vld [vmem:[#allocation2 + $0x10] sm:$0xff]
        %v296 = vld [vmem:[#allocation2 + $0x18] sm:$0xff]
        %v297 = vld [vmem:[#allocation2 + $0x20] sm:$0xff]
        %v298 = vld [vmem:[#allocation2 + $0x28] sm:$0xff]
        %v299 = vld [vmem:[#allocation2 + $0x30] sm:$0xff]
        %v300 = vld [vmem:[#allocation2 + $0x38] sm:$0xff]
        %v301 = vld [vmem:[#allocation2 + $0x40] sm:$0xff]
        %v302 = vld [vmem:[#allocation2 + $0x48] sm:$0xff]
        %v303 = vld [vmem:[#allocation2 + $0x50] sm:$0xff]
        %v304 = vld [vmem:[#allocation2 + $0x58] sm:$0xff]
        %v305 = vld [vmem:[#allocation2 + $0x60] sm:$0xff]
        %v306 = vld [vmem:[#allocation2 + $0x68] sm:$0xff]
        %v307 = vld [vmem:[#allocation2 + $0x70] sm:$0xff]
        %v308 = vld [vmem:[#allocation2 + $0x78] sm:$0xff]
        %v309 = vadd.f32 %v293, %v246
        %v310 = vadd.f32 %v294, %v249
        %v311 = vadd.f32 %v295, %v252
        %v312 = vadd.f32 %v296, %v255
        %v313 = vadd.f32 %v297, %v258
        %v314 = vadd.f32 %v298, %v261
        %v315 = vadd.f32 %v299, %v264
        %v316 = vadd.f32 %v300, %v267
        %v317 = vadd.f32 %v301, %v270
        %v318 = vadd.f32 %v302, %v273
        %v319 = vadd.f32 %v303, %v276
        %v320 = vadd.f32 %v304, %v279
        %v321 = vadd.f32 %v305, %v282
        %v322 = vadd.f32 %v306, %v285
        %v323 = vadd.f32 %v307, %v288
        %v324 = vadd.f32 %v308, %v291
        %325 = vst [vmem:[#allocation2] sm:$0xff] %v309
        %326 = vst [vmem:[#allocation2 + $0x8] sm:$0xff] %v310
        %327 = vst [vmem:[#allocation2 + $0x10] sm:$0xff] %v311
        %328 = vst [vmem:[#allocation2 + $0x18] sm:$0xff] %v312
        %329 = vst [vmem:[#allocation2 + $0x20] sm:$0xff] %v313
        %330 = vst [vmem:[#allocation2 + $0x28] sm:$0xff] %v314
        %331 = vst [vmem:[#allocation2 + $0x30] sm:$0xff] %v315
        %332 = vst [vmem:[#allocation2 + $0x38] sm:$0xff] %v316
        %333 = vst [vmem:[#allocation2 + $0x40] sm:$0xff] %v317
        %334 = vst [vmem:[#allocation2 + $0x48] sm:$0xff] %v318
        %335 = vst [vmem:[#allocation2 + $0x50] sm:$0xff] %v319
        %336 = vst [vmem:[#allocation2 + $0x58] sm:$0xff] %v320
        %337 = vst [vmem:[#allocation2 + $0x60] sm:$0xff] %v321
        %338 = vst [vmem:[#allocation2 + $0x68] sm:$0xff] %v322
        %339 = vst [vmem:[#allocation2 + $0x70] sm:$0xff] %v323
        %340 = vst [vmem:[#allocation2 + $0x78] sm:$0xff] %v324
        %341 = vmatpush.msra.mxu0 %v291
        %342 = vmatpush.msra.mxu0 %v288
        %343 = vmatpush.msra.mxu0 %v285
        %344 = vmatpush.msra.mxu0 %v282
        %345 = vmatpush.msra.mxu0 %v279
        %346 = vmatpush.msra.mxu0 %v276
        %347 = vmatpush.msra.mxu0 %v273
        %348 = vmatpush.msra.mxu0 %v270
        %349 = vmatpush.msra.mxu0 %v267
        %350 = vmatpush.msra.mxu0 %v264
        %351 = vmatpush.msra.mxu0 %v261
        %352 = vmatpush.msra.mxu0 %v258
        %353 = vmatpush.msra.mxu0 %v255
        %354 = vmatpush.msra.mxu0 %v252
        %355 = vmatpush.msra.mxu0 %v249
        %356 = vmatpush.msra.mxu0 %v246
        %357 = vmatmul.f32.gmra.mxu0 %v180
        %v358 = vpop.f32.mrf.mxu0
        %v359 = vadd.f32 0.0, %v358
        %360 = vmatmul.f32.gmra.mxu0 %v181
        %v361 = vpop.f32.mrf.mxu0
        %v362 = vadd.f32 0.0, %v361
        %363 = vmatmul.f32.gmra.mxu0 %v182
        %v364 = vpop.f32.mrf.mxu0
        %v365 = vadd.f32 0.0, %v364
        %366 = vmatmul.f32.gmra.mxu0 %v183
        %v367 = vpop.f32.mrf.mxu0
        %v368 = vadd.f32 0.0, %v367
        %369 = vmatmul.f32.gmra.mxu0 %v184
        %v370 = vpop.f32.mrf.mxu0
        %v371 = vadd.f32 0.0, %v370
        %372 = vmatmul.f32.gmra.mxu0 %v185
        %v373 = vpop.f32.mrf.mxu0
        %v374 = vadd.f32 0.0, %v373
        %375 = vmatmul.f32.gmra.mxu0 %v186
        %v376 = vpop.f32.mrf.mxu0
        %v377 = vadd.f32 0.0, %v376
        %378 = vmatmul.f32.gmra.mxu0 %v187
        %v379 = vpop.f32.mrf.mxu0
        %v380 = vadd.f32 0.0, %v379
        %381 = vmatmul.f32.gmra.mxu0 %v188
        %v382 = vpop.f32.mrf.mxu0
        %v383 = vadd.f32 0.0, %v382
        %384 = vmatmul.f32.gmra.mxu0 %v189
        %v385 = vpop.f32.mrf.mxu0
        %v386 = vadd.f32 0.0, %v385
        %387 = vmatmul.f32.gmra.mxu0 %v190
        %v388 = vpop.f32.mrf.mxu0
        %v389 = vadd.f32 0.0, %v388
        %390 = vmatmul.f32.gmra.mxu0 %v191
        %v391 = vpop.f32.mrf.mxu0
        %v392 = vadd.f32 0.0, %v391
        %393 = vmatmul.f32.gmra.mxu0 %v192
        %v394 = vpop.f32.mrf.mxu0
        %v395 = vadd.f32 0.0, %v394
        %396 = vmatmul.f32.gmra.mxu0 %v193
        %v397 = vpop.f32.mrf.mxu0
        %v398 = vadd.f32 0.0, %v397
        %399 = vmatmul.f32.gmra.mxu0 %v194
        %v400 = vpop.f32.mrf.mxu0
        %v401 = vadd.f32 0.0, %v400
        %402 = vmatmul.f32.gmra.mxu0 %v195
        %v403 = vpop.f32.mrf.mxu0
        %v404 = vadd.f32 0.0, %v403
        %405 = vdwg.mxu0
        %v406 = vld [vmem:[#allocation2] sm:$0xff]
        %v407 = vld [vmem:[#allocation2 + $0x8] sm:$0xff]
        %v408 = vld [vmem:[#allocation2 + $0x10] sm:$0xff]
        %v409 = vld [vmem:[#allocation2 + $0x18] sm:$0xff]
        %v410 = vld [vmem:[#allocation2 + $0x20] sm:$0xff]
        %v411 = vld [vmem:[#allocation2 + $0x28] sm:$0xff]
        %v412 = vld [vmem:[#allocation2 + $0x30] sm:$0xff]
        %v413 = vld [vmem:[#allocation2 + $0x38] sm:$0xff]
        %v414 = vld [vmem:[#allocation2 + $0x40] sm:$0xff]
        %v415 = vld [vmem:[#allocation2 + $0x48] sm:$0xff]
        %v416 = vld [vmem:[#allocation2 + $0x50] sm:$0xff]
        %v417 = vld [vmem:[#allocation2 + $0x58] sm:$0xff]
        %v418 = vld [vmem:[#allocation2 + $0x60] sm:$0xff]
        %v419 = vld [vmem:[#allocation2 + $0x68] sm:$0xff]
        %v420 = vld [vmem:[#allocation2 + $0x70] sm:$0xff]
        %v421 = vld [vmem:[#allocation2 + $0x78] sm:$0xff]
        %v422 = vadd.f32 %v406, %v359
        %v423 = vadd.f32 %v407, %v362
        %v424 = vadd.f32 %v408, %v365
        %v425 = vadd.f32 %v409, %v368
        %v426 = vadd.f32 %v410, %v371
        %v427 = vadd.f32 %v411, %v374
        %v428 = vadd.f32 %v412, %v377
        %v429 = vadd.f32 %v413, %v380
        %v430 = vadd.f32 %v414, %v383
        %v431 = vadd.f32 %v415, %v386
        %v432 = vadd.f32 %v416, %v389
        %v433 = vadd.f32 %v417, %v392
        %v434 = vadd.f32 %v418, %v395
        %v435 = vadd.f32 %v419, %v398
        %v436 = vadd.f32 %v420, %v401
        %v437 = vadd.f32 %v421, %v404
        %438 = vst [vmem:[#allocation2] sm:$0xff] %v422
        %439 = vst [vmem:[#allocation2 + $0x8] sm:$0xff] %v423
        %440 = vst [vmem:[#allocation2 + $0x10] sm:$0xff] %v424
        %441 = vst [vmem:[#allocation2 + $0x18] sm:$0xff] %v425
        %442 = vst [vmem:[#allocation2 + $0x20] sm:$0xff] %v426
        %443 = vst [vmem:[#allocation2 + $0x28] sm:$0xff] %v427
        %444 = vst [vmem:[#allocation2 + $0x30] sm:$0xff] %v428
        %445 = vst [vmem:[#allocation2 + $0x38] sm:$0xff] %v429
        %446 = vst [vmem:[#allocation2 + $0x40] sm:$0xff] %v430
        %447 = vst [vmem:[#allocation2 + $0x48] sm:$0xff] %v431
        %448 = vst [vmem:[#allocation2 + $0x50] sm:$0xff] %v432
        %449 = vst [vmem:[#allocation2 + $0x58] sm:$0xff] %v433
        %450 = vst [vmem:[#allocation2 + $0x60] sm:$0xff] %v434
        %451 = vst [vmem:[#allocation2 + $0x68] sm:$0xff] %v435
        %452 = vst [vmem:[#allocation2 + $0x70] sm:$0xff] %v436
        %453 = vst [vmem:[#allocation2 + $0x78] sm:$0xff] %v437
        %454 = vmatpush.msra.mxu0 %v404
        %455 = vmatpush.msra.mxu0 %v401
        %456 = vmatpush.msra.mxu0 %v398
        %457 = vmatpush.msra.mxu0 %v395
        %458 = vmatpush.msra.mxu0 %v392
        %459 = vmatpush.msra.mxu0 %v389
        %460 = vmatpush.msra.mxu0 %v386
        %461 = vmatpush.msra.mxu0 %v383
        %462 = vmatpush.msra.mxu0 %v380
        %463 = vmatpush.msra.mxu0 %v377
        %464 = vmatpush.msra.mxu0 %v374
        %465 = vmatpush.msra.mxu0 %v371
        %466 = vmatpush.msra.mxu0 %v368
        %467 = vmatpush.msra.mxu0 %v365
        %468 = vmatpush.msra.mxu0 %v362
        %469 = vmatpush.msra.mxu0 %v359
        %470 = vmatmul.f32.gmra.mxu0 %v180
        %v471 = vpop.f32.mrf.mxu0
        %v472 = vadd.f32 0.0, %v471
        %473 = vmatmul.f32.gmra.mxu0 %v181
        %v474 = vpop.f32.mrf.mxu0
        %v475 = vadd.f32 0.0, %v474
        %476 = vmatmul.f32.gmra.mxu0 %v182
        %v477 = vpop.f32.mrf.mxu0
        %v478 = vadd.f32 0.0, %v477
        %479 = vmatmul.f32.gmra.mxu0 %v183
        %v480 = vpop.f32.mrf.mxu0
        %v481 = vadd.f32 0.0, %v480
        %482 = vmatmul.f32.gmra.mxu0 %v184
        %v483 = vpop.f32.mrf.mxu0
        %v484 = vadd.f32 0.0, %v483
        %485 = vmatmul.f32.gmra.mxu0 %v185
        %v486 = vpop.f32.mrf.mxu0
        %v487 = vadd.f32 0.0, %v486
        %488 = vmatmul.f32.gmra.mxu0 %v186
        %v489 = vpop.f32.mrf.mxu0
        %v490 = vadd.f32 0.0, %v489
        %491 = vmatmul.f32.gmra.mxu0 %v187
        %v492 = vpop.f32.mrf.mxu0
        %v493 = vadd.f32 0.0, %v492
        %494 = vmatmul.f32.gmra.mxu0 %v188
        %v495 = vpop.f32.mrf.mxu0
        %v496 = vadd.f32 0.0, %v495
        %497 = vmatmul.f32.gmra.mxu0 %v189
        %v498 = vpop.f32.mrf.mxu0
        %v499 = vadd.f32 0.0, %v498
        %500 = vmatmul.f32.gmra.mxu0 %v190
        %v501 = vpop.f32.mrf.mxu0
        %v502 = vadd.f32 0.0, %v501
        %503 = vmatmul.f32.gmra.mxu0 %v191
        %v504 = vpop.f32.mrf.mxu0
        %v505 = vadd.f32 0.0, %v504
        %506 = vmatmul.f32.gmra.mxu0 %v192
        %v507 = vpop.f32.mrf.mxu0
        %v508 = vadd.f32 0.0, %v507
        %509 = vmatmul.f32.gmra.mxu0 %v193
        %v510 = vpop.f32.mrf.mxu0
        %v511 = vadd.f32 0.0, %v510
        %512 = vmatmul.f32.gmra.mxu0 %v194
        %v513 = vpop.f32.mrf.mxu0
        %v514 = vadd.f32 0.0, %v513
        %515 = vmatmul.f32.gmra.mxu0 %v195
        %v516 = vpop.f32.mrf.mxu0
        %v517 = vadd.f32 0.0, %v516
        %518 = vdwg.mxu0
        %v519 = vld [vmem:[#allocation2] sm:$0xff]
        %v520 = vld [vmem:[#allocation2 + $0x8] sm:$0xff]
        %v521 = vld [vmem:[#allocation2 + $0x10] sm:$0xff]
        %v522 = vld [vmem:[#allocation2 + $0x18] sm:$0xff]
        %v523 = vld [vmem:[#allocation2 + $0x20] sm:$0xff]
        %v524 = vld [vmem:[#allocation2 + $0x28] sm:$0xff]
        %v525 = vld [vmem:[#allocation2 + $0x30] sm:$0xff]
        %v526 = vld [vmem:[#allocation2 + $0x38] sm:$0xff]
        %v527 = vld [vmem:[#allocation2 + $0x40] sm:$0xff]
        %v528 = vld [vmem:[#allocation2 + $0x48] sm:$0xff]
        %v529 = vld [vmem:[#allocation2 + $0x50] sm:$0xff]
        %v530 = vld [vmem:[#allocation2 + $0x58] sm:$0xff]
        %v531 = vld [vmem:[#allocation2 + $0x60] sm:$0xff]
        %v532 = vld [vmem:[#allocation2 + $0x68] sm:$0xff]
        %v533 = vld [vmem:[#allocation2 + $0x70] sm:$0xff]
        %v534 = vld [vmem:[#allocation2 + $0x78] sm:$0xff]
        %v535 = vadd.f32 %v519, %v472
        %v536 = vadd.f32 %v520, %v475
        %v537 = vadd.f32 %v521, %v478
        %v538 = vadd.f32 %v522, %v481
        %v539 = vadd.f32 %v523, %v484
        %v540 = vadd.f32 %v524, %v487
        %v541 = vadd.f32 %v525, %v490
        %v542 = vadd.f32 %v526, %v493
        %v543 = vadd.f32 %v527, %v496
        %v544 = vadd.f32 %v528, %v499
        %v545 = vadd.f32 %v529, %v502
        %v546 = vadd.f32 %v530, %v505
        %v547 = vadd.f32 %v531, %v508
        %v548 = vadd.f32 %v532, %v511
        %v549 = vadd.f32 %v533, %v514
        %v550 = vadd.f32 %v534, %v517
        %551 = vst [vmem:[#allocation2] sm:$0xff] %v535
        %552 = vst [vmem:[#allocation2 + $0x8] sm:$0xff] %v536
        %553 = vst [vmem:[#allocation2 + $0x10] sm:$0xff] %v537
        %554 = vst [vmem:[#allocation2 + $0x18] sm:$0xff] %v538
        %555 = vst [vmem:[#allocation2 + $0x20] sm:$0xff] %v539
        %556 = vst [vmem:[#allocation2 + $0x28] sm:$0xff] %v540
        %557 = vst [vmem:[#allocation2 + $0x30] sm:$0xff] %v541
        %558 = vst [vmem:[#allocation2 + $0x38] sm:$0xff] %v542
        %559 = vst [vmem:[#allocation2 + $0x40] sm:$0xff] %v543
        %560 = vst [vmem:[#allocation2 + $0x48] sm:$0xff] %v544
        %561 = vst [vmem:[#allocation2 + $0x50] sm:$0xff] %v545
        %562 = vst [vmem:[#allocation2 + $0x58] sm:$0xff] %v546
        %563 = vst [vmem:[#allocation2 + $0x60] sm:$0xff] %v547
        %564 = vst [vmem:[#allocation2 + $0x68] sm:$0xff] %v548
        %565 = vst [vmem:[#allocation2 + $0x70] sm:$0xff] %v549
        %566 = vst [vmem:[#allocation2 + $0x78] sm:$0xff] %v550
        %v567 = vld [vmem:[#allocation2] sm:$0xff]
        %v568 = vld [vmem:[#allocation2 + $0x8] sm:$0xff]
        %v569 = vld [vmem:[#allocation2 + $0x10] sm:$0xff]
        %v570 = vld [vmem:[#allocation2 + $0x18] sm:$0xff]
        %v571 = vld [vmem:[#allocation2 + $0x20] sm:$0xff]
        %v572 = vld [vmem:[#allocation2 + $0x28] sm:$0xff]
        %v573 = vld [vmem:[#allocation2 + $0x30] sm:$0xff]
        %v574 = vld [vmem:[#allocation2 + $0x38] sm:$0xff]
        %v575 = vld [vmem:[#allocation2 + $0x40] sm:$0xff]
        %v576 = vld [vmem:[#allocation2 + $0x48] sm:$0xff]
        %v577 = vld [vmem:[#allocation2 + $0x50] sm:$0xff]
        %v578 = vld [vmem:[#allocation2 + $0x58] sm:$0xff]
        %v579 = vld [vmem:[#allocation2 + $0x60] sm:$0xff]
        %v580 = vld [vmem:[#allocation2 + $0x68] sm:$0xff]
        %v581 = vld [vmem:[#allocation2 + $0x70] sm:$0xff]
        %v582 = vld [vmem:[#allocation2 + $0x78] sm:$0xff]
        %583 = vst [vmem:[%s179] sm:$0xff] %v567
        %584 = vst [vmem:[%s179 + $0x8] sm:$0xff] %v568
        %585 = vst [vmem:[%s179 + $0x10] sm:$0xff] %v569
        %586 = vst [vmem:[%s179 + $0x18] sm:$0xff] %v570
        %587 = vst [vmem:[%s179 + $0x20] sm:$0xff] %v571
        %588 = vst [vmem:[%s179 + $0x28] sm:$0xff] %v572
        %589 = vst [vmem:[%s179 + $0x30] sm:$0xff] %v573
        %590 = vst [vmem:[%s179 + $0x38] sm:$0xff] %v574
        %591 = vst [vmem:[%s179 + $0x40] sm:$0xff] %v575
        %592 = vst [vmem:[%s179 + $0x48] sm:$0xff] %v576
        %593 = vst [vmem:[%s179 + $0x50] sm:$0xff] %v577
        %594 = vst [vmem:[%s179 + $0x58] sm:$0xff] %v578
        %595 = vst [vmem:[%s179 + $0x60] sm:$0xff] %v579
        %596 = vst [vmem:[%s179 + $0x68] sm:$0xff] %v580
        %597 = vst [vmem:[%s179 + $0x70] sm:$0xff] %v581
        %598 = vst [vmem:[%s179 + $0x78] sm:$0xff] %v582
        %s599 = sand.u32 %s75, 1
        %s600 = scalar_lea.sflag [#allocation5], %s599
        %s601 = sand.u32 %s75, 1
        %s602 = smul.addr %s601, 128
        %s603 = scalar_lea.vmem [#allocation8], %s602
        // Predicated region
        $region37: #{tpu_custom_call.1} parent=27 // pred_check
          %p604 = pneg %p85
        $region38: #{tpu_custom_call.1} parent=27 // pred_check_branch
          %606 = sbr.rel (%p604) target = $region40
        $region39: #{tpu_custom_call.1} parent=27 // pred_region
          %608 = vsyncadd %s600, 0
          %s609 = smul.addr %s20, 8
          %s610 = scalar_lea.hbm %s2, %s609
          %s611 = sshll.u32 %s603, 4
          %s612 = int_to_ptr.vmem [resolvable:$true] %s611
          %s613 = sshll.u32 %s610, 4
          %s614 = int_to_ptr.hbm [resolvable:$true] %s613
          %619 = dma.vmem_to_hbm [thread:$0]  %s612, 2048, %s614, %s600, 128, 256, 8
        $region40: #{tpu_custom_call.1} parent=27 // pred_fallthru
          _
      $region28: #{tpu_custom_call.1} parent=5 // pred_fallthru
        _
      %p620 = scmp.le.s32.totalorder 2, %s15
      // Predicated region
      $region41: #{tpu_custom_call.1} parent=5 // pred_check
        %p621 = pneg %p620
      $region42: #{tpu_custom_call.1} parent=5 // pred_check_branch
        %623 = sbr.rel (%p621) target = $region44
      $region43: #{tpu_custom_call.1} parent=5 // pred_region
        %s624 = ssub.s32 %s15, 2
        // Predicated region
        $region45: #{tpu_custom_call.1} parent=43 // pred_check
          %p625 = pneg %p91
        $region46: #{tpu_custom_call.1} parent=43 // pred_check_branch
          %627 = sbr.rel (%p625) target = $region48
        $region47: #{tpu_custom_call.1} parent=43 // pred_region
          %s628 = sand.u32 %s76, 1
          %s629 = scalar_lea.sflag [#allocation5], %s628
          %s630 = sand.u32 %s76, 1
          %s631 = smul.addr %s630, 128
          %s632 = scalar_lea.vmem [#allocation8], %s631
          %634 = dma.done %s629, 2048
        $region48: #{tpu_custom_call.1} parent=43 // pred_fallthru
          _
      $region44: #{tpu_custom_call.1} parent=5 // pred_fallthru
        _
    $region6: #{tpu_custom_call.1} parent=1 // loop_footer
      %s19 = sadd.s32 1, %s15
    $region7: #{tpu_custom_call.1} parent=1 // loop_footer_branch
      %14 = sbr.rel target = $region3
    $region8: #{tpu_custom_call.1} parent=1 // loop_exit
      _
    %635 = vsyncpa [#allocation4], 1
    %s636 = scalar_lea.sflag [#allocation4], 1
    %637 = vsyncpa %s636, 1
    %638 = vsyncpa [#allocation7], 1
    %s639 = scalar_lea.sflag [#allocation7], 1
    %640 = vsyncpa %s639, 1
    %641 = vsyncpa [#allocation5], 1
    %s642 = scalar_lea.sflag [#allocation5], 1
    %643 = vsyncpa %s642, 1

</llo_original>
